<compile_context>
chip_gen: v7x
topology: tpu7x:2x2x1
jax: 0.10.0
libtpu: 0.0.40
codegen_flags: <defaults>
</compile_context>

<pallas_src>
import jax
import jax.numpy as jnp
from jax import lax
from jax.experimental import pallas as pl
from jax.experimental.pallas import tpu as pltpu

LN_EPS = 1e-5                    # PyTorch nn.LayerNorm default
VMEM_BUDGET = 40 << 20           # conservative per-step budget (fits v7x 64 MiB)
SMALL_BATCH_ROWS = 256           # below this, a single un-pipelined call wins


def norm_linear_kernel(x_ref, w_ref, b_ref, o_ref):
    """Fused LayerNorm (affine pre-folded into w/b) + Linear on one batch tile."""
    x = x_ref[...].astype(jnp.float32)                      # [TB, D]
    inv_d = 1.0 / x.shape[-1]
    # One-pass statistics: the two lane reductions can overlap on the XLU.
    s1 = jnp.sum(x, axis=-1, keepdims=True)
    s2 = jnp.sum(x * x, axis=-1, keepdims=True)
    mean = s1 * inv_d
    var = s2 * inv_d - mean * mean
    y = (x - mean) * lax.rsqrt(var + LN_EPS)                # [TB, D] f32

    # Linear(D -> D_OUT).  gamma is folded into w, beta@w into b (wrapper).
    z = jnp.dot(y.astype(w_ref.dtype), w_ref[...],
                preferred_element_type=jnp.float32)          # [TB, D_OUT] f32
    z = z + b_ref[...]
    o_ref[...] = z.astype(o_ref.dtype)


def _round_up(v, m):
    return ((v + m - 1) // m) * m


def _grid_step_bytes(bb, d, d_out, x_bytes, w_bytes, out_bytes):
    return (2 * bb * d * x_bytes            # x tile (double-buffered)
            + 2 * d * d_out * w_bytes       # resident weight allocation
            + 2 * d_out * 4                 # bias
            + 2 * bb * d_out * out_bytes    # out tile (double-buffered)
            + 3 * bb * max(d, d_out) * 4)   # f32 LN / matmul intermediates


def _small_path_bytes(b, d, d_out, x_bytes, w_bytes, out_bytes):
    return (b * d * x_bytes + d * d_out * w_bytes + d_out * 4
            + b * d_out * out_bytes + 3 * b * max(d, d_out) * 4)


def adaptive_norm_forward(x, gamma, beta, w, b, *, block_b=1024,
                          weight_dtype=jnp.float32, out_dtype=None):
    """x: [B, D]; gamma, beta: [D]; w: [D, D_OUT] (pre-transposed); b: [D_OUT]."""
    B, D = x.shape
    D_OUT = w.shape[1]
    out_dtype = x.dtype if out_dtype is None else out_dtype
    x_bytes = jnp.dtype(x.dtype).itemsize
    w_bytes = jnp.dtype(weight_dtype).itemsize
    out_bytes = jnp.dtype(out_dtype).itemsize

    # Fold the LayerNorm affine into the linear layer (in f32, cast once).
    w_f32 = w.astype(jnp.float32)
    w_fold = (gamma.astype(jnp.float32)[:, None] * w_f32).astype(weight_dtype)
    b_fold = (beta.astype(jnp.float32) @ w_f32
              + b.astype(jnp.float32)).reshape(1, D_OUT)

    out_shape = jax.ShapeDtypeStruct((B, D_OUT), out_dtype)

    # --- tiny batches: one un-pipelined, fully VMEM-resident invocation ---
    if (B <= SMALL_BATCH_ROWS
            and _small_path_bytes(B, D, D_OUT, x_bytes, w_bytes,
                                  out_bytes) <= VMEM_BUDGET):
        vmem = pl.BlockSpec(memory_space=pltpu.MemorySpace.VMEM)
        return pl.pallas_call(
            norm_linear_kernel,
            out_shape=out_shape,
            in_specs=[vmem] * 3,
            out_specs=vmem,
        )(x, w_fold, b_fold)

    # --- pipelined path: batch-tiled grid, masked partial last block ---
    # At least 2 steps so both v7x TensorCores run; no more steps than the
    # block_b cap requires (per-step overhead ~0.35us dominates at small D).
    num_steps = max(2, pl.cdiv(B, block_b))
    bb = _round_up(pl.cdiv(B, num_steps), 8)
    while bb > 8 and _grid_step_bytes(bb, D, D_OUT, x_bytes, w_bytes,
                                      out_bytes) > VMEM_BUDGET:
        bb = max(8, _round_up(bb // 2, 8))

    est = _grid_step_bytes(bb, D, D_OUT, x_bytes, w_bytes, out_bytes)
    vmem_limit = int(min(64 << 20, max(32 << 20, round(1.5 * est))))

    # Note: the resident weight/bias use a constant index_map (no re-DMA per
    # step); single-buffering them (pl.Buffered(1)) only matters once
    # D*D_OUT*w_bytes reaches tens of MiB, so it is not forced here.
    return pl.pallas_call(
        norm_linear_kernel,
        out_shape=out_shape,
        grid=(pl.cdiv(B, bb),),
        in_specs=[
            pl.BlockSpec((bb, D), lambda i: (i, 0)),
            pl.BlockSpec((D, D_OUT), lambda i: (0, 0)),
            pl.BlockSpec((1, D_OUT), lambda i: (0, 0)),
        ],
        out_specs=pl.BlockSpec((bb, D_OUT), lambda i: (i, 0)),
        compiler_params=pltpu.CompilerParams(
            dimension_semantics=("parallel",),
            vmem_limit_bytes=vmem_limit),
    )(x, w_fold, b_fold)


def reference_f32(x, gamma, beta, w, b):
    """Pure-JAX reference matching the PyTorch module in f32."""
    x = x.astype(jnp.float32)
    mean = jnp.mean(x, axis=-1, keepdims=True)
    var = jnp.mean((x - mean) ** 2, axis=-1, keepdims=True)
    y = (x - mean) * lax.rsqrt(var + LN_EPS) * gamma + beta
    return y @ w + b


if __name__ == "__main__":
    # Lane-dense sizes: feature dims are multiples of 128.
    B, D = 8, 128            # model.output_size == D -> model = Linear(D, D)
    D_OUT = D

    key = jax.random.PRNGKey(0)
    kx, kg, kb, kw, kbias, kx2 = jax.random.split(key, 6)

    x = jax.random.normal(kx, (B, D), jnp.float32)
    gamma = 1.0 + 0.1 * jax.random.normal(kg, (D,), jnp.float32)
    beta = 0.1 * jax.random.normal(kb, (D,), jnp.float32)
    bound = 1.0 / (D ** 0.5)
    w = jax.random.uniform(kw, (D, D_OUT), jnp.float32, -bound, bound)
    b = jax.random.uniform(kbias, (D_OUT,), jnp.float32, -bound, bound)

    # --- small-batch path: single VMEM-resident invocation, f32 parity ---
    out = jax.block_until_ready(adaptive_norm_forward(x, gamma, beta, w, b))
    assert out.shape == (B, D_OUT) and out.dtype == jnp.float32
    assert jnp.allclose(out, reference_f32(x, gamma, beta, w, b),
                        atol=1e-4, rtol=1e-4), "small-batch mismatch vs f32 ref"

    # --- pipelined path: non-divisible batch, masked partial last block ---
    B2 = 600                                   # not a multiple of the tile
    x2 = jax.random.normal(kx2, (B2, D), jnp.float32)
    out2 = jax.block_until_ready(
        adaptive_norm_forward(x2, gamma, beta, w, b, block_b=1024))
    assert out2.shape == (B2, D_OUT)
    assert jnp.allclose(out2, reference_f32(x2, gamma, beta, w, b),
                        atol=1e-4, rtol=1e-4), "tiled mismatch vs f32 ref"

    # --- bf16 input/output path (halves HBM traffic; LN stats stay f32) ---
    x2_bf16 = x2.astype(jnp.bfloat16)
    out3 = jax.block_until_ready(
        adaptive_norm_forward(x2_bf16, gamma, beta, w, b,
                              weight_dtype=jnp.bfloat16))
    assert out3.shape == (B2, D_OUT) and out3.dtype == jnp.bfloat16
    ref3 = reference_f32(x2_bf16.astype(jnp.float32), gamma, beta, w, b)
    assert jnp.allclose(out3.astype(jnp.float32), ref3,
                        atol=3e-2, rtol=3e-2), "bf16 path mismatch vs f32 ref"

    print("KERNEL_OK")
</pallas_src>

<mosaic_0001>
module attributes {stable_mosaic.version = 11 : i64} {
  func.func @norm_linear_kernel(%arg0: memref<8x128xf32, #tpu.memory_space<vmem>>, %arg1: memref<128x128xf32, #tpu.memory_space<vmem>>, %arg2: memref<1x128xf32, #tpu.memory_space<vmem>>, %arg3: memref<8x128xf32, #tpu.memory_space<vmem>>) attributes {dimension_semantics = [], scalar_prefetch = 0 : i64, scratch_operands = 0 : i64, tpu.core_type = #tpu.core_type<tc>} {
    %c0 = arith.constant 0 : index
    %c0_0 = arith.constant 0 : index
    %0 = vector.load %arg0[%c0, %c0_0] : memref<8x128xf32, #tpu.memory_space<vmem>>, vector<8x128xf32>
    %cst = arith.constant dense<0.000000e+00> : vector<8xf32>
    %1 = vector.multi_reduction <add>, %0, %cst [1] : vector<8x128xf32> to vector<8xf32>
    %2 = vector.shape_cast %1 : vector<8xf32> to vector<8x1xf32>
    %3 = arith.mulf %0, %0 : vector<8x128xf32>
    %cst_1 = arith.constant dense<0.000000e+00> : vector<8xf32>
    %4 = vector.multi_reduction <add>, %3, %cst_1 [1] : vector<8x128xf32> to vector<8xf32>
    %5 = vector.shape_cast %4 : vector<8xf32> to vector<8x1xf32>
    %cst_2 = arith.constant 7.812500e-03 : f32
    %6 = vector.broadcast %cst_2 : f32 to vector<8x1xf32>
    %7 = arith.mulf %2, %6 : vector<8x1xf32>
    %cst_3 = arith.constant 7.812500e-03 : f32
    %8 = vector.broadcast %cst_3 : f32 to vector<8x1xf32>
    %9 = arith.mulf %5, %8 : vector<8x1xf32>
    %10 = arith.mulf %7, %7 : vector<8x1xf32>
    %11 = arith.subf %9, %10 : vector<8x1xf32>
    %12 = vector.broadcast %7 : vector<8x1xf32> to vector<8x128xf32>
    %13 = arith.subf %0, %12 : vector<8x128xf32>
    %cst_4 = arith.constant 9.99999974E-6 : f32
    %14 = vector.broadcast %cst_4 : f32 to vector<8x1xf32>
    %15 = arith.addf %11, %14 : vector<8x1xf32>
    %16 = math.rsqrt %15 : vector<8x1xf32>
    %17 = vector.broadcast %16 : vector<8x1xf32> to vector<8x128xf32>
    %18 = arith.mulf %13, %17 : vector<8x128xf32>
    %c0_5 = arith.constant 0 : index
    %c0_6 = arith.constant 0 : index
    %19 = vector.load %arg1[%c0_5, %c0_6] : memref<128x128xf32, #tpu.memory_space<vmem>>, vector<128x128xf32>
    %cst_7 = arith.constant dense<0.000000e+00> : vector<8x128xf32>
    %20 = tpu.matmul %18, %19, %cst_7 {dimension_numbers = #tpu.dot_dimension_numbers<[1], [0], [0], [1], [0, 0, 1, 1], [], []>} : vector<8x128xf32>, vector<128x128xf32>, vector<8x128xf32> -> vector<8x128xf32>
    %c0_8 = arith.constant 0 : index
    %c0_9 = arith.constant 0 : index
    %21 = vector.load %arg2[%c0_8, %c0_9] : memref<1x128xf32, #tpu.memory_space<vmem>>, vector<1x128xf32>
    %22 = vector.broadcast %21 : vector<1x128xf32> to vector<8x128xf32>
    %23 = arith.addf %20, %22 : vector<8x128xf32>
    %c0_10 = arith.constant 0 : index
    %c0_11 = arith.constant 0 : index
    %24 = vector.load %arg3[%c0_10, %c0_11] : memref<8x128xf32, #tpu.memory_space<vmem>>, vector<8x128xf32>
    tpu.vector_store %arg3[%c0_10, %c0_11], %23 {strides = array<i32>} : memref<8x128xf32, #tpu.memory_space<vmem>>, vector<8x128xf32>,
    return
  }
}

</mosaic_0001>

<llo_original>
// kernel: tpu_custom_call.1
$region0: #{tpu_custom_call.1}
  #allocation0 [shape = 'u32[]', space=smem, size = 0x4, offset = 0x4, fixed_abs, tag = 'smem constant byte address 0x4 - core index']
  #allocation1 [shape = 'u32[144,128]{1,0:T(1,128)}', space=vmem, size = 0x12000, scoped, tag = 'internal scratch']
  %s0 = inlined_call_operand.hbm [shape: f32[8,128], index: 0, kind: input, shape index: {}]
  %s1 = inlined_call_operand.hbm [shape: f32[128,128], index: 1, kind: input, shape index: {}]
  %s2 = inlined_call_operand.vmem [shape: f32[1,128], index: 2, kind: input, shape index: {}]
  %s3 = inlined_call_operand.hbm [shape: f32[8,128], index: 3, kind: output, shape index: {}]
  %s4 = sld [smem:[#allocation0]]
  $region30: #{tpu_custom_call.1} parent=0
    _
  %s6 = ssub.s32 1, %s4
  %s7 = scalar_select 0, %s6, %s4
  $region1: #{tpu_custom_call.1} parent=0
    #allocation2 [shape = 'u8[4096]{0}', space=vmem, size = 0x1000, scoped, tag = 'input window, operand 0, single buffered']
    #allocation3 [shape = 's32[1]{0}', space=sflag, size = 0x4, scoped, tag = 'scoped memory for tpu_custom_call.1']
    #allocation4 [shape = 's32[1]{0}', space=sflag, size = 0x4, scoped, tag = 'scoped memory for tpu_custom_call.1']
    #allocation5 [shape = 'u8[65536]{0}', space=vmem, size = 0x10000, scoped, tag = 'input window, operand 1, single buffered']
    #allocation6 [shape = 's32[1]{0}', space=sflag, size = 0x4, scoped, tag = 'scoped memory for tpu_custom_call.1']
    #allocation7 [shape = 'u8[4096]{0}', space=vmem, size = 0x1000, scoped, tag = 'output window, operand 0, single buffered']
    %8 = vsyncpa [#allocation3], 0
    %9 = vsyncpa [#allocation6], 0
    %10 = vsyncpa [#allocation4], 0
    // Predicated region
    $region2: #{tpu_custom_call.1} parent=1 // pred_check
      _
    $region3: #{tpu_custom_call.1} parent=1 // pred_check_branch
      %12 = sbr.rel (0) target = $region5
    $region4: #{tpu_custom_call.1} parent=1 // pred_region
      %s14 = ssub.s32 128, 128
      %15 = vsyncadd [#allocation3], %s14
      %s17 = sshll.u32 [#allocation2], 4
      %s18 = int_to_ptr.vmem [resolvable:$true] %s17
      %20 = dma.hbm_to_vmem [thread:$0]  %s0, 128, %s18, [#allocation3]
    $region5: #{tpu_custom_call.1} parent=1 // pred_fallthru
      _
    // Predicated region
    $region6: #{tpu_custom_call.1} parent=1 // pred_check
      _
    $region7: #{tpu_custom_call.1} parent=1 // pred_check_branch
      %22 = sbr.rel (0) target = $region9
    $region8: #{tpu_custom_call.1} parent=1 // pred_region
      %s24 = ssub.s32 2048, 2048
      %25 = vsyncadd [#allocation6], %s24
      %s26 = sshll.u32 [#allocation5], 4
      %s27 = int_to_ptr.vmem [resolvable:$true] %s26
      %32 = dma.hbm_to_vmem [thread:$0]  %s1, 2048, %s27, [#allocation6], 128, 128, 8
    $region9: #{tpu_custom_call.1} parent=1 // pred_fallthru
      _
    // Predicated region
    $region10: #{tpu_custom_call.1} parent=1 // pred_check
      _
    $region11: #{tpu_custom_call.1} parent=1 // pred_check_branch
      %34 = sbr.rel (0) target = $region13
    $region12: #{tpu_custom_call.1} parent=1 // pred_region
      _
    $region13: #{tpu_custom_call.1} parent=1 // pred_fallthru
      _
    // Predicated region
    $region14: #{tpu_custom_call.1} parent=1 // pred_check
      _
    $region15: #{tpu_custom_call.1} parent=1 // pred_check_branch
      %36 = sbr.rel (0) target = $region17
    $region16: #{tpu_custom_call.1} parent=1 // pred_region
      %37 = dma.done [#allocation3], 128
    $region17: #{tpu_custom_call.1} parent=1 // pred_fallthru
      _
    // Predicated region
    $region18: #{tpu_custom_call.1} parent=1 // pred_check
      _
    $region19: #{tpu_custom_call.1} parent=1 // pred_check_branch
      %39 = sbr.rel (0) target = $region21
    $region20: #{tpu_custom_call.1} parent=1 // pred_region
      %40 = dma.done [#allocation6], 2048
    $region21: #{tpu_custom_call.1} parent=1 // pred_fallthru
      _
    %v41 = vld [vmem:[#allocation2] sm:$0xff]
    %42 = vadd.xlane.f32.xlu0 %v41
    %v43 = vpop.xlane.xlu0 %42
    %v44 = vmul.f32 %v41, %v41
    %45 = vadd.xlane.f32.xlu0 %v44
    %v46 = vpop.xlane.xlu0 %45
    %v47 = vmul.f32 %v43, 0.0078125
    %v48 = vmul.f32 %v46, 0.0078125
    %v49 = vmul.f32 %v47, %v47
    %v50 = vsub.f32 %v48, %v49
    %v51 = vsub.f32 %v41, %v47
    %v52 = vadd.f32 %v50, 1e-05
    %v53 = vrsqrt.pop %v52
    %v54 = vmul.f32 %v51, %v53
    %v55 = vld [vmem:[#allocation5] sm:$0xff]
    %v56 = vld [vmem:[#allocation5 + $0x8] sm:$0xff]
    %v57 = vld [vmem:[#allocation5 + $0x10] sm:$0xff]
    %v58 = vld [vmem:[#allocation5 + $0x18] sm:$0xff]
    %v59 = vld [vmem:[#allocation5 + $0x20] sm:$0xff]
    %v60 = vld [vmem:[#allocation5 + $0x28] sm:$0xff]
    %v61 = vld [vmem:[#allocation5 + $0x30] sm:$0xff]
    %v62 = vld [vmem:[#allocation5 + $0x38] sm:$0xff]
    %v63 = vld [vmem:[#allocation5 + $0x40] sm:$0xff]
    %v64 = vld [vmem:[#allocation5 + $0x48] sm:$0xff]
    %v65 = vld [vmem:[#allocation5 + $0x50] sm:$0xff]
    %v66 = vld [vmem:[#allocation5 + $0x58] sm:$0xff]
    %v67 = vld [vmem:[#allocation5 + $0x60] sm:$0xff]
    %v68 = vld [vmem:[#allocation5 + $0x68] sm:$0xff]
    %v69 = vld [vmem:[#allocation5 + $0x70] sm:$0xff]
    %v70 = vld [vmem:[#allocation5 + $0x78] sm:$0xff]
    %v71 = vld [vmem:[%s2] sm:$0x1]
    %v73 = vlaneseq
    %v74 = vshrl.u32 %v73, 7
    %v75 = vsub.s32 0, %v74
    %v76 = vrot.slane %v71, %v75
    %78 = vmatprep.subr.mxu0 0.0
    %79 = vmatpush1.msra.mxu0 %v55
    %80 = vmatprep.subr.mxu0 0.0
    %81 = vmatpush1.msra.mxu0 %v56
    %82 = vmatprep.subr.mxu0 0.0
    %83 = vmatpush1.msra.mxu0 %v57
    %84 = vmatprep.subr.mxu0 0.0
    %85 = vmatpush1.msra.mxu0 %v58
    %86 = vmatprep.subr.mxu0 0.0
    %87 = vmatpush1.msra.mxu0 %v59
    %88 = vmatprep.subr.mxu0 0.0
    %89 = vmatpush1.msra.mxu0 %v60
    %90 = vmatprep.subr.mxu0 0.0
    %91 = vmatpush1.msra.mxu0 %v61
    %92 = vmatprep.subr.mxu0 0.0
    %93 = vmatpush1.msra.mxu0 %v62
    %94 = vmatprep.subr.mxu0 0.0
    %95 = vmatpush1.msra.mxu0 %v63
    %96 = vmatprep.subr.mxu0 0.0
    %97 = vmatpush1.msra.mxu0 %v64
    %98 = vmatprep.subr.mxu0 0.0
    %99 = vmatpush1.msra.mxu0 %v65
    %100 = vmatprep.subr.mxu0 0.0
    %101 = vmatpush1.msra.mxu0 %v66
    %102 = vmatprep.subr.mxu0 0.0
    %103 = vmatpush1.msra.mxu0 %v67
    %104 = vmatprep.subr.mxu0 0.0
    %105 = vmatpush1.msra.mxu0 %v68
    %106 = vmatprep.subr.mxu0 0.0
    %107 = vmatpush1.msra.mxu0 %v69
    %108 = vmatprep.subr.mxu0 0.0
    %109 = vmatpush1.msra.mxu0 %v70
    %110 = vmatprep.subr.mxu0 0.0
    %111 = vmatpush1.msra.mxu0 0.0
    %112 = vmatprep.subr.mxu0 0.0
    %113 = vmatpush1.msra.mxu0 0.0
    %114 = vmatprep.subr.mxu0 0.0
    %115 = vmatpush1.msra.mxu0 0.0
    %116 = vmatprep.subr.mxu0 0.0
    %117 = vmatpush1.msra.mxu0 0.0
    %118 = vmatprep.subr.mxu0 0.0
    %119 = vmatpush1.msra.mxu0 0.0
    %120 = vmatprep.subr.mxu0 0.0
    %121 = vmatpush1.msra.mxu0 0.0
    %122 = vmatprep.subr.mxu0 0.0
    %123 = vmatpush1.msra.mxu0 0.0
    %124 = vmatprep.subr.mxu0 0.0
    %125 = vmatpush1.msra.mxu0 0.0
    %126 = vmatprep.subr.mxu0 0.0
    %127 = vmatpush1.msra.mxu0 0.0
    %128 = vmatprep.subr.mxu0 0.0
    %129 = vmatpush1.msra.mxu0 0.0
    %130 = vmatprep.subr.mxu0 0.0
    %131 = vmatpush1.msra.mxu0 0.0
    %132 = vmatprep.subr.mxu0 0.0
    %133 = vmatpush1.msra.mxu0 0.0
    %134 = vmatprep.subr.mxu0 0.0
    %135 = vmatpush1.msra.mxu0 0.0
    %136 = vmatprep.subr.mxu0 0.0
    %137 = vmatpush1.msra.mxu0 0.0
    %138 = vmatprep.subr.mxu0 0.0
    %139 = vmatpush1.msra.mxu0 0.0
    %140 = vmatprep.subr.mxu0 0.0
    %141 = vmatpush1.msra.mxu0 0.0
    %142 = vmatprep.mubr.f32.mxu0 0.0
    %143 = vmatmul.mubr.f32.gmra.mrb[0].mxu0 %v54
    %v144 = vpop.f32.mrb[0].mxu0
    %v145 = vadd.f32 %v76, %v144
    %v146 = vpop.f32.mrb[0].mxu0
    %147 = vdwg.mxu0
    %148 = vst [vmem:[#allocation7] sm:$0xff] %v145
    // Predicated region
    $region22: #{tpu_custom_call.1} parent=1 // pred_check
      _
    $region23: #{tpu_custom_call.1} parent=1 // pred_check_branch
      %150 = sbr.rel (0) target = $region25
    $region24: #{tpu_custom_call.1} parent=1 // pred_region
      %s152 = ssub.s32 128, 128
      %153 = vsyncadd [#allocation4], %s152
      %s155 = sshll.u32 [#allocation7], 4
      %s156 = int_to_ptr.vmem [resolvable:$true] %s155
      %158 = dma.vmem_to_hbm [thread:$0]  %s156, 128, %s3, [#allocation4]
    $region25: #{tpu_custom_call.1} parent=1 // pred_fallthru
      _
    // Predicated region
    $region26: #{tpu_custom_call.1} parent=1 // pred_check
      _
    $region27: #{tpu_custom_call.1} parent=1 // pred_check_branch
      %160 = sbr.rel (0) target = $region29
    $region28: #{tpu_custom_call.1} parent=1 // pred_region
      %161 = dma.done [#allocation4], 128
    $region29: #{tpu_custom_call.1} parent=1 // pred_fallthru
      _
    %162 = vsyncpa [#allocation3], 1
    %163 = vsyncpa [#allocation6], 1
    %164 = vsyncpa [#allocation4], 1

</llo_original>
